<compile_context>
chip_gen: v7x
topology: tpu7x:2x2x1
jax: 0.10.0
libtpu: 0.0.40
codegen_flags: <defaults>
</compile_context>

<pallas_src>
import functools

import jax
import jax.numpy as jnp
from jax.experimental import pallas as pl
from jax.experimental.pallas import tpu as pltpu

_EPS = 1e-5


# ----------------------------- kernels ------------------------------------- #

def _stats(xf, inv_t):
    # Single walk over the (bb, T, CT) slab: sum and sum-of-squares over the time axis.
    s1 = jnp.sum(xf, axis=1, keepdims=True)          # (bb, 1, CT)
    s2 = jnp.sum(xf * xf, axis=1, keepdims=True)     # (bb, 1, CT)
    mean = s1 * inv_t
    var = jnp.maximum(s2 * inv_t - mean * mean, 0.0)  # biased var (unbiased=False)
    return mean, var


def _apply_scale_shift(x, xf, scale, shift, out_dtype):
    # Elementwise pass: y = x * scale + shift.  Stay in bf16/f16 for sub-f32 inputs
    # (stats were already accumulated in f32); v5e handles the upcast transparently.
    if x.dtype == jnp.float32:
        y = xf * scale + shift
    else:
        y = x * scale.astype(x.dtype) + shift.astype(x.dtype)
    return y.astype(out_dtype)


def _norm_kernel(x_ref, w_ref, b_ref, o_ref, *, affine: bool):
    x = x_ref[...]                                    # (bb, T, CT)
    xf = x.astype(jnp.float32)
    inv_t = jnp.float32(1.0 / x.shape[1])

    mean, var = _stats(xf, inv_t)
    inv_std = jax.lax.rsqrt(var + _EPS)               # rsqrt on (bb,1,CT) only

    # (x - mean) * inv_std * w + b  ==  x * scale + shift
    scale = inv_std
    shift = -mean * inv_std
    if affine:
        w = w_ref[...].astype(jnp.float32)            # (1, CT)
        b = b_ref[...].astype(jnp.float32)            # (1, CT)
        scale = scale * w
        shift = shift * w + b

    o_ref[...] = _apply_scale_shift(x, xf, scale, shift, o_ref.dtype)


def _denorm_kernel(x_ref, w_ref, b_ref, o_ref, *, affine: bool):
    # Faithful to the reference module: mean/std are recomputed from the incoming tensor
    # (the torch module does not cache stats from the norm pass).
    x = x_ref[...]
    xf = x.astype(jnp.float32)
    inv_t = jnp.float32(1.0 / x.shape[1])

    mean, var = _stats(xf, inv_t)
    std = jnp.sqrt(var + _EPS)

    # ((x - b) / w) * std + mean  ==  x * (std/w) + (mean - b*std/w)
    if affine:
        w = w_ref[...].astype(jnp.float32)
        b = b_ref[...].astype(jnp.float32)
        inv_w = 1.0 / w                               # reciprocal per channel, not per element
        scale = std * inv_w                           # (bb, 1, CT)
        shift = mean - b * scale
    else:
        scale = std
        shift = mean

    o_ref[...] = _apply_scale_shift(x, xf, scale, shift, o_ref.dtype)


# ----------------------------- tiling helpers ------------------------------ #

def _pick_channel_tile(C, max_ct=1024):
    """Channel tile: full C when small / not lane-aligned, else a multiple of 128."""
    if C <= max_ct or C % 128 != 0:
        return C
    for ct in range(max_ct, 127, -128):
        if C % ct == 0:
            return ct
    return C


def _pick_batch_block(B, T, CT, itemsize, n_channel_tiles, target_bytes=1 << 20):
    """Largest divisor of B whose (bb, T, CT) block stays ~<=1 MiB; keep >=2 grid steps
    when possible so both v7x TensorCores get work."""
    divisors = [d for d in range(1, B + 1) if B % d == 0]
    fitting = [d for d in divisors if d * T * CT * itemsize <= target_bytes]
    if not fitting:
        return 1
    bb = max(fitting)
    if n_channel_tiles == 1 and B >= 2 and B // bb < 2:
        smaller = [d for d in fitting if B // d >= 2]
        if smaller:
            bb = max(smaller)
    return bb


# ----------------------------- pallas_call wrapper -------------------------- #

def _run_kernel(x, weight, bias, *, affine: bool, mode: str):
    B, T, C = x.shape
    CT = _pick_channel_tile(C)
    n_ct = C // CT
    bb = _pick_batch_block(B, T, CT, x.dtype.itemsize, n_ct)

    kern = _norm_kernel if mode == "norm" else _denorm_kernel
    kernel = functools.partial(kern, affine=affine)

    return pl.pallas_call(
        kernel,
        out_shape=jax.ShapeDtypeStruct((B, T, C), x.dtype),
        grid_spec=pltpu.PrefetchScalarGridSpec(
            num_scalar_prefetch=0,
            grid=(B // bb, n_ct),
            in_specs=[
                pl.BlockSpec((bb, T, CT), lambda i, j: (i, 0, j)),   # x slab
                pl.BlockSpec((1, CT), lambda i, j: (0, j)),          # affine weight
                pl.BlockSpec((1, CT), lambda i, j: (0, j)),          # affine bias
            ],
            out_specs=pl.BlockSpec((bb, T, CT), lambda i, j: (i, 0, j)),
        ),
        compiler_params=pltpu.CompilerParams(
            dimension_semantics=("parallel", "parallel"),
            vmem_limit_bytes=32 * 1024 * 1024,   # fits v5e/v6e/v7x scoped-VMEM budgets
        ),
    )(x, weight, bias)


# ----------------------------- module wrapper ------------------------------- #

class Normalize:
    """JAX/Pallas port of layers/StandardNorm.Normalize."""

    def __init__(self, enc_in, affine=True, non_norm=False):
        self.affine = affine
        self.non_norm = non_norm
        if self.affine:
            # deterministic init, matching nn.Parameter(torch.ones/zeros(1, 1, enc_in))
            self.affine_weight = jnp.ones((1, 1, enc_in), dtype=jnp.float32)
            self.affine_bias = jnp.zeros((1, 1, enc_in), dtype=jnp.float32)
        else:
            self.affine_weight = None
            self.affine_bias = None

    def __call__(self, x, mode="norm"):
        if self.non_norm:
            return x
        if mode not in ("norm", "denorm"):
            raise ValueError(f"Unsupported mode: {mode}")

        if x.ndim == 2:
            x = x[..., None]          # torch version unsqueezes and keeps the extra dim
        elif x.ndim < 2 or x.ndim > 3:
            raise ValueError(f"Input tensor x must be 2D or 3D, but got shape {x.shape}")

        C = x.shape[2]
        if self.affine:
            if self.affine_weight.shape[2] != C:
                # mirror of the torch module's lazy re-init on channel mismatch
                self.affine_weight = jnp.ones((1, 1, C), dtype=jnp.float32)
                self.affine_bias = jnp.zeros((1, 1, C), dtype=jnp.float32)
            w2d = self.affine_weight.reshape(1, C)
            b2d = self.affine_bias.reshape(1, C)
        else:
            # dummies (never read inside the kernel when affine=False)
            w2d = jnp.ones((1, C), dtype=jnp.float32)
            b2d = jnp.zeros((1, C), dtype=jnp.float32)

        return _run_kernel(x, w2d, b2d, affine=self.affine, mode=mode)


# ----------------------------- reference & test ----------------------------- #

def _reference_norm(x, w, b, affine):
    mean = jnp.mean(x, axis=1, keepdims=True)
    std = jnp.sqrt(jnp.var(x, axis=1, keepdims=True) + _EPS)
    y = (x - mean) / std
    if affine:
        y = y * w + b
    return y


def _reference_denorm(x, w, b, affine):
    mean = jnp.mean(x, axis=1, keepdims=True)
    std = jnp.sqrt(jnp.var(x, axis=1, keepdims=True) + _EPS)
    y = x
    if affine:
        y = (y - b) / w
    return y * std + mean


if __name__ == "__main__":
    key = jax.random.PRNGKey(0)
    B, T, C = 2, 8, 32
    x = jax.random.normal(key, (B, T, C), dtype=jnp.float32)

    model = Normalize(enc_in=C, affine=True, non_norm=False)

    # norm path
    y = jax.block_until_ready(model(x, mode="norm"))
    y_ref = _reference_norm(x, model.affine_weight, model.affine_bias, affine=True)
    assert jnp.allclose(y, y_ref, atol=1e-4, rtol=1e-4), "norm mismatch vs reference"

    # denorm path (reference module recomputes stats of the incoming tensor)
    z = jax.block_until_ready(model(y, mode="denorm"))
    z_ref = _reference_denorm(y, model.affine_weight, model.affine_bias, affine=True)
    assert z.shape == x.shape
    assert jnp.allclose(z, z_ref, atol=1e-4, rtol=1e-4), "denorm mismatch vs reference"

    # affine=False path
    model_na = Normalize(enc_in=C, affine=False, non_norm=False)
    y2 = jax.block_until_ready(model_na(x, mode="norm"))
    y2_ref = _reference_norm(x, None, None, affine=False)
    assert jnp.allclose(y2, y2_ref, atol=1e-4, rtol=1e-4), "non-affine norm mismatch"

    print("KERNEL_OK")
</pallas_src>

<mosaic_0001>
module attributes {stable_mosaic.version = 11 : i64} {
  func.func @_norm_kernel(%arg0: i32, %arg1: i32, %arg2: memref<1x8x32xf32, #tpu.memory_space<vmem>>, %arg3: memref<1x32xf32, #tpu.memory_space<vmem>>, %arg4: memref<1x32xf32, #tpu.memory_space<vmem>>, %arg5: memref<1x8x32xf32, #tpu.memory_space<vmem>>) attributes {dimension_semantics = [#tpu.dimension_semantics<parallel>, #tpu.dimension_semantics<parallel>], iteration_bounds = array<i64: 2, 1>, scalar_prefetch = 0 : i64, scratch_operands = 0 : i64, tpu.core_type = #tpu.core_type<tc>, window_params = [{transform_indices = @transform_0, window_bounds = array<i64: 1, 8, 32>}, {transform_indices = @transform_1, window_bounds = array<i64: 1, 32>}, {transform_indices = @transform_2, window_bounds = array<i64: 1, 32>}, {transform_indices = @transform_3, window_bounds = array<i64: 1, 8, 32>}]} {
    %c0 = arith.constant 0 : index
    %c0_0 = arith.constant 0 : index
    %c0_1 = arith.constant 0 : index
    %0 = vector.load %arg2[%c0, %c0_0, %c0_1] : memref<1x8x32xf32, #tpu.memory_space<vmem>>, vector<1x8x32xf32>
    %cst = arith.constant dense<0.000000e+00> : vector<1x32xf32>
    %1 = vector.multi_reduction <add>, %0, %cst [1] : vector<1x8x32xf32> to vector<1x32xf32>
    %2 = vector.shape_cast %1 : vector<1x32xf32> to vector<1x1x32xf32>
    %3 = arith.mulf %0, %0 : vector<1x8x32xf32>
    %cst_2 = arith.constant dense<0.000000e+00> : vector<1x32xf32>
    %4 = vector.multi_reduction <add>, %3, %cst_2 [1] : vector<1x8x32xf32> to vector<1x32xf32>
    %5 = vector.shape_cast %4 : vector<1x32xf32> to vector<1x1x32xf32>
    %cst_3 = arith.constant 1.250000e-01 : f32
    %6 = vector.broadcast %cst_3 : f32 to vector<1x1x32xf32>
    %7 = arith.mulf %2, %6 : vector<1x1x32xf32>
    %cst_4 = arith.constant 1.250000e-01 : f32
    %8 = vector.broadcast %cst_4 : f32 to vector<1x1x32xf32>
    %9 = arith.mulf %5, %8 : vector<1x1x32xf32>
    %10 = arith.mulf %7, %7 : vector<1x1x32xf32>
    %11 = arith.subf %9, %10 : vector<1x1x32xf32>
    %cst_5 = arith.constant 0.000000e+00 : f32
    %12 = vector.broadcast %cst_5 : f32 to vector<1x1x32xf32>
    %13 = arith.maximumf %11, %12 : vector<1x1x32xf32>
    %cst_6 = arith.constant 9.99999974E-6 : f32
    %14 = vector.broadcast %cst_6 : f32 to vector<1x1x32xf32>
    %15 = arith.addf %13, %14 : vector<1x1x32xf32>
    %16 = math.rsqrt %15 : vector<1x1x32xf32>
    %cst_7 = arith.constant 0.000000e+00 : f32
    %17 = vector.broadcast %cst_7 : f32 to vector<1x1x32xf32>
    %18 = arith.subf %17, %7 : vector<1x1x32xf32>
    %19 = arith.mulf %18, %16 : vector<1x1x32xf32>
    %c0_8 = arith.constant 0 : index
    %c0_9 = arith.constant 0 : index
    %20 = vector.load %arg3[%c0_8, %c0_9] : memref<1x32xf32, #tpu.memory_space<vmem>>, vector<1x32xf32>
    %c0_10 = arith.constant 0 : index
    %c0_11 = arith.constant 0 : index
    %21 = vector.load %arg4[%c0_10, %c0_11] : memref<1x32xf32, #tpu.memory_space<vmem>>, vector<1x32xf32>
    %22 = vector.shape_cast %20 : vector<1x32xf32> to vector<1x1x32xf32>
    %23 = arith.mulf %16, %22 : vector<1x1x32xf32>
    %24 = vector.shape_cast %20 : vector<1x32xf32> to vector<1x1x32xf32>
    %25 = arith.mulf %19, %24 : vector<1x1x32xf32>
    %26 = vector.shape_cast %21 : vector<1x32xf32> to vector<1x1x32xf32>
    %27 = arith.addf %25, %26 : vector<1x1x32xf32>
    %28 = vector.broadcast %23 : vector<1x1x32xf32> to vector<1x8x32xf32>
    %29 = arith.mulf %0, %28 : vector<1x8x32xf32>
    %30 = vector.broadcast %27 : vector<1x1x32xf32> to vector<1x8x32xf32>
    %31 = arith.addf %29, %30 : vector<1x8x32xf32>
    %c0_12 = arith.constant 0 : index
    %c0_13 = arith.constant 0 : index
    %c0_14 = arith.constant 0 : index
    %32 = vector.load %arg5[%c0_12, %c0_13, %c0_14] : memref<1x8x32xf32, #tpu.memory_space<vmem>>, vector<1x8x32xf32>
    tpu.vector_store %arg5[%c0_12, %c0_13, %c0_14], %31 {strides = array<i32>} : memref<1x8x32xf32, #tpu.memory_space<vmem>>, vector<1x8x32xf32>,
    return
  }
  func.func @transform_0(%arg0: i32, %arg1: i32) -> (i32, i32, i32) {
    %c0_i32 = arith.constant 0 : i32
    %c0_i32_0 = arith.constant 0 : i32
    return %arg0, %c0_i32, %arg1 : i32, i32, i32
  }
  func.func @transform_1(%arg0: i32, %arg1: i32) -> (i32, i32) {
    %c0_i32 = arith.constant 0 : i32
    %c0_i32_0 = arith.constant 0 : i32
    return %c0_i32, %arg1 : i32, i32
  }
  func.func @transform_2(%arg0: i32, %arg1: i32) -> (i32, i32) {
    %c0_i32 = arith.constant 0 : i32
    %c0_i32_0 = arith.constant 0 : i32
    return %c0_i32, %arg1 : i32, i32
  }
  func.func @transform_3(%arg0: i32, %arg1: i32) -> (i32, i32, i32) {
    %c0_i32 = arith.constant 0 : i32
    %c0_i32_0 = arith.constant 0 : i32
    return %arg0, %c0_i32, %arg1 : i32, i32, i32
  }
}

</mosaic_0001>

<llo_original>
// kernel: tpu_custom_call.1
$region0: #{tpu_custom_call.1}
  #allocation0 [shape = 'u32[]', space=smem, size = 0x4, offset = 0x4, fixed_abs, tag = 'smem constant byte address 0x4 - core index']
  #allocation1 [shape = 'u32[144,128]{1,0:T(1,128)}', space=vmem, size = 0x12000, scoped, tag = 'internal scratch']
  %s0 = inlined_call_operand.hbm [shape: f32[2,8,32], index: 0, kind: input, shape index: {}]
  %s1 = inlined_call_operand.vmem [shape: f32[1,32], index: 1, kind: input, shape index: {}]
  %s2 = inlined_call_operand.vmem [shape: f32[1,32], index: 2, kind: input, shape index: {}]
  %s3 = inlined_call_operand.hbm [shape: f32[2,8,32], index: 3, kind: output, shape index: {}]
  %s4 = sld [smem:[#allocation0]]
  $region49: #{tpu_custom_call.1} parent=0
    _
  %s6 = ssub.s32 1, %s4
  %s7 = scalar_select 0, %s6, %s4
  $region1: #{tpu_custom_call.1} parent=0
    #allocation2 [shape = 'u8[8192]{0}', space=vmem, size = 0x2000, scoped, tag = 'input window, operand 0']
    #allocation3 [shape = 's32[2]{0}', space=sflag, size = 0x8, scoped, tag = 'scoped memory for tpu_custom_call.1']
    #allocation4 [shape = 's32[2]{0}', space=sflag, size = 0x8, scoped, tag = 'scoped memory for tpu_custom_call.1']
    #allocation5 [shape = 'u8[8192]{0}', space=vmem, size = 0x2000, scoped, tag = 'output window, operand 0']
    %8 = vsyncpa [#allocation3], 0
    %s9 = scalar_lea.sflag [#allocation3], 1
    %10 = vsyncpa %s9, 0
    %11 = vsyncpa [#allocation4], 0
    %s12 = scalar_lea.sflag [#allocation4], 1
    %13 = vsyncpa %s12, 0
    loop: start=0, step=1, limit=4
    $region2: #{tpu_custom_call.1} parent=1 // loop_pre_header
      _
    $region3: #{tpu_custom_call.1} parent=1 // loop_header
      %s15 = sphi 0, %s19
      %p16 = scmp.ge.s32.totalorder %s15, 4
      %s22 = sphi 0, %s34
      %s23 = sphi 0, %s30
      %s24 = sphi 0, %s22
      %s25 = sphi 0, %s23
      %s26 = sphi 0, %s24
      %s27 = sphi 0, %s25
      %s39 = sphi 0, %s41
      %s42 = sphi 0, %s39
      %s43 = sphi 0, %s42
      %s59 = sphi 0, %s43
      %s65 = sphi 0, %s67
      %s68 = sphi 0, %s65
      %s69 = sphi 0, %s68
      %s85 = sphi 0, %s69
      %s91 = sphi 0, %s93
      %s94 = sphi 0, %s91
      %s95 = sphi 0, %s94
      %s111 = sphi 0, %s95
      %s119 = sphi 0, %s121
      %s122 = sphi 0, %s119
      %s123 = sphi 0, %s122
      %s139 = sphi 0, %s123
    $region4: #{tpu_custom_call.1} parent=1 // loop_header_branch
      %18 = sbr.rel (%p16) target = $region8
    $region5: #{tpu_custom_call.1} parent=1 // loop_body
      %s20 = ssub.s32 %s15, 1
      %s21 = ssub.s32 %s15, 2
      %s28 = sadd.s32 1, %s23
      %p29 = scmp.ge.s32.totalorder %s28, 1
      %s30 = scalar_select %p29, 0, %s28
      %s31 = sadd.s32 1, %s22
      %s32 = scalar_select %p29, %s31, %s22
      %p33 = scmp.ge.s32.totalorder %s32, 2
      %s34 = scalar_select %p33, 0, %s32
      %s35 = ssub.s32 %s22, %s34
      %s36 = ssub.s32 %s23, %s30
      %s37 = sor.u32 %s35, %s36
      %p38 = scmp.eq.s32.totalorder %s37, 0
      %s40 = sadd.s32 %s39, 1
      %s41 = scalar_select %p38, %s39, %s40
      %p44 = pneg %p38
      %p45 = scmp.eq.s32.totalorder %s15, 1
      %p46 = por %p44, %p45
      %p47 = scmp.ne.s32.totalorder %s39, %s42
      %p48 = scmp.eq.s32.totalorder %s15, 0
      %p49 = por %p47, %p48
      %p50 = scmp.ne.s32.totalorder %s39, %s42
      %p51 = scmp.eq.s32.totalorder %s20, 1
      %p52 = por %p50, %p51
      %p53 = scmp.ne.s32.totalorder %s42, %s43
      %p54 = scmp.eq.s32.totalorder %s20, 0
      %p55 = por %p53, %p54
      %p56 = scmp.ne.s32.totalorder %s42, %s43
      %p57 = scmp.eq.s32.totalorder %s21, 1
      %p58 = por %p56, %p57
      %p60 = scmp.ne.s32.totalorder %s43, %s59
      %p61 = scmp.eq.s32.totalorder %s21, 0
      %p62 = por %p60, %p61
      %s63 = ssub.s32 %s23, %s30
      %p64 = scmp.eq.s32.totalorder %s63, 0
      %s66 = sadd.s32 %s65, 1
      %s67 = scalar_select %p64, %s65, %s66
      %p70 = pneg %p64
      %p71 = scmp.eq.s32.totalorder %s15, 1
      %p72 = por %p70, %p71
      %p73 = scmp.ne.s32.totalorder %s65, %s68
      %p74 = scmp.eq.s32.totalorder %s15, 0
      %p75 = por %p73, %p74
      %p76 = scmp.ne.s32.totalorder %s65, %s68
      %p77 = scmp.eq.s32.totalorder %s20, 1
      %p78 = por %p76, %p77
      %p79 = scmp.ne.s32.totalorder %s68, %s69
      %p80 = scmp.eq.s32.totalorder %s20, 0
      %p81 = por %p79, %p80
      %p82 = scmp.ne.s32.totalorder %s68, %s69
      %p83 = scmp.eq.s32.totalorder %s21, 1
      %p84 = por %p82, %p83
      %p86 = scmp.ne.s32.totalorder %s69, %s85
      %p87 = scmp.eq.s32.totalorder %s21, 0
      %p88 = por %p86, %p87
      %s89 = ssub.s32 %s23, %s30
      %p90 = scmp.eq.s32.totalorder %s89, 0
      %s92 = sadd.s32 %s91, 1
      %s93 = scalar_select %p90, %s91, %s92
      %p96 = pneg %p90
      %p97 = scmp.eq.s32.totalorder %s15, 1
      %p98 = por %p96, %p97
      %p99 = scmp.ne.s32.totalorder %s91, %s94
      %p100 = scmp.eq.s32.totalorder %s15, 0
      %p101 = por %p99, %p100
      %p102 = scmp.ne.s32.totalorder %s91, %s94
      %p103 = scmp.eq.s32.totalorder %s20, 1
      %p104 = por %p102, %p103
      %p105 = scmp.ne.s32.totalorder %s94, %s95
      %p106 = scmp.eq.s32.totalorder %s20, 0
      %p107 = por %p105, %p106
      %p108 = scmp.ne.s32.totalorder %s94, %s95
      %p109 = scmp.eq.s32.totalorder %s21, 1
      %p110 = por %p108, %p109
      %p112 = scmp.ne.s32.totalorder %s95, %s111
      %p113 = scmp.eq.s32.totalorder %s21, 0
      %p114 = por %p112, %p113
      %s115 = ssub.s32 %s22, %s34
      %s116 = ssub.s32 %s23, %s30
      %s117 = sor.u32 %s115, %s116
      %p118 = scmp.eq.s32.totalorder %s117, 0
      %s120 = sadd.s32 %s119, 1
      %s121 = scalar_select %p118, %s119, %s120
      %p124 = pneg %p118
      %p125 = scmp.eq.s32.totalorder %s15, 1
      %p126 = por %p124, %p125
      %p127 = scmp.ne.s32.totalorder %s119, %s122
      %p128 = scmp.eq.s32.totalorder %s15, 0
      %p129 = por %p127, %p128
      %p130 = scmp.ne.s32.totalorder %s119, %s122
      %p131 = scmp.eq.s32.totalorder %s20, 1
      %p132 = por %p130, %p131
      %p133 = scmp.ne.s32.totalorder %s122, %s123
      %p134 = scmp.eq.s32.totalorder %s20, 0
      %p135 = por %p133, %p134
      %p136 = scmp.ne.s32.totalorder %s122, %s123
      %p137 = scmp.eq.s32.totalorder %s21, 1
      %p138 = por %p136, %p137
      %p140 = scmp.ne.s32.totalorder %s123, %s139
      %p141 = scmp.eq.s32.totalorder %s21, 0
      %p142 = por %p140, %p141
      %p143 = scmp.le.s32.totalorder 1, %s15
      %p144 = scmp.lt.s32.totalorder %s15, 3
      %p145 = pnand %p143, %p144
      %p146 = pneg %p145
      // Predicated region
      $region9: #{tpu_custom_call.1} parent=5 // pred_check
        _
      $region10: #{tpu_custom_call.1} parent=5 // pred_check_branch
        %148 = sbr.rel (%p145) target = $region12
      $region11: #{tpu_custom_call.1} parent=5 // pred_region
        %s149 = ssub.s32 %s15, 1
        // Predicated region
        $region13: #{tpu_custom_call.1} parent=11 // pred_check
          %p150 = pneg %p81
        $region14: #{tpu_custom_call.1} parent=11 // pred_check_branch
          %152 = sbr.rel (%p150) target = $region16
        $region15: #{tpu_custom_call.1} parent=11 // pred_region
          %p153 = scmp.lt.s32.totalorder %s25, 0
          %s154 = scalar_select %p153, %s25, 0
          %s155 = scalar_lea.vmem %s1, %s154
        $region16: #{tpu_custom_call.1} parent=11 // pred_fallthru
          _
        // Predicated region
        $region17: #{tpu_custom_call.1} parent=11 // pred_check
          %p156 = pneg %p107
        $region18: #{tpu_custom_call.1} parent=11 // pred_check_branch
          %158 = sbr.rel (%p156) target = $region20
        $region19: #{tpu_custom_call.1} parent=11 // pred_region
          %p159 = scmp.lt.s32.totalorder %s25, 0
          %s160 = scalar_select %p159, %s25, 0
          %s161 = scalar_lea.vmem %s2, %s160
        $region20: #{tpu_custom_call.1} parent=11 // pred_fallthru
          _
      $region12: #{tpu_custom_call.1} parent=5 // pred_fallthru
        _
      %p162 = scmp.lt.s32.totalorder %s15, 2
      // Predicated region
      $region21: #{tpu_custom_call.1} parent=5 // pred_check
        %p163 = pneg %p162
      $region22: #{tpu_custom_call.1} parent=5 // pred_check_branch
        %165 = sbr.rel (%p163) target = $region24
      $region23: #{tpu_custom_call.1} parent=5 // pred_region
        // Predicated region
        $region25: #{tpu_custom_call.1} parent=23 // pred_check
          %p166 = pneg %p49
        $region26: #{tpu_custom_call.1} parent=23 // pred_check_branch
          %168 = sbr.rel (%p166) target = $region28
        $region27: #{tpu_custom_call.1} parent=23 // pred_region
          %s169 = sand.u32 %s39, 1
          %s170 = scalar_lea.sflag [#allocation3], %s169
          %s171 = sand.u32 %s39, 1
          %s172 = smul.addr %s171, 8
          %s173 = scalar_lea.vmem [#allocation2], %s172
          %s175 = ssub.s32 128, 128
          %176 = vsyncadd %s170, %s175
          %s177 = sadd.s32 %s23, %s22
          %s178 = smul.addr %s177, 128
          %s179 = scalar_lea.hbm %s0, %s178
          %s181 = sshll.u32 %s173, 4
          %s182 = int_to_ptr.vmem [resolvable:$true] %s181
          %184 = dma.hbm_to_vmem [thread:$0]  %s179, 128, %s182, %s170
        $region28: #{tpu_custom_call.1} parent=23 // pred_fallthru
          _
      $region24: #{tpu_custom_call.1} parent=5 // pred_fallthru
        _
      %p185 = scmp.le.s32.totalorder 1, %s15
      %p186 = scmp.lt.s32.totalorder %s15, 3
      %p187 = pnand %p185, %p186
      %p188 = pneg %p187
      // Predicated region
      $region29: #{tpu_custom_call.1} parent=5 // pred_check
        _
      $region30: #{tpu_custom_call.1} parent=5 // pred_check_branch
        %190 = sbr.rel (%p187) target = $region32
      $region31: #{tpu_custom_call.1} parent=5 // pred_region
        %s191 = ssub.s32 %s15, 1
        %s192 = sand.u32 %s42, 1
        %s193 = scalar_lea.sflag [#allocation3], %s192
        %s194 = sand.u32 %s42, 1
        %s195 = smul.addr %s194, 8
        %s196 = scalar_lea.vmem [#allocation2], %s195
        // Predicated region
        $region33: #{tpu_custom_call.1} parent=31 // pred_check
          %p197 = pneg %p55
        $region34: #{tpu_custom_call.1} parent=31 // pred_check_branch
          %199 = sbr.rel (%p197) target = $region36
        $region35: #{tpu_custom_call.1} parent=31 // pred_region
          %200 = dma.done %s193, 128
        $region36: #{tpu_custom_call.1} parent=31 // pred_fallthru
          _
        %s201 = sand.u32 %s42, 1
        %s202 = scalar_lea.sflag [#allocation3], %s201
        %s203 = sand.u32 %s42, 1
        %s204 = smul.addr %s203, 8
        %s205 = scalar_lea.vmem [#allocation2], %s204
        %p206 = pneg %p55
        %p207 = pneg %p52
        %p208 = scmp.lt.s32.totalorder %s25, 0
        %s209 = scalar_select %p208, %s25, 0
        %s210 = scalar_lea.vmem %s1, %s209
        %p211 = pneg %p81
        %p212 = pneg %p78
        %p213 = scmp.lt.s32.totalorder %s25, 0
        %s214 = scalar_select %p213, %s25, 0
        %s215 = scalar_lea.vmem %s2, %s214
        %p216 = pneg %p107
        %p217 = pneg %p104
        %p218 = pneg %p135
        %p219 = pneg %p132
        %s220 = sand.u32 %s122, 1
        %s221 = scalar_lea.sflag [#allocation4], %s220
        %s222 = sand.u32 %s122, 1
        %s223 = smul.addr %s222, 8
        %s224 = scalar_lea.vmem [#allocation5], %s223
        %p225 = scmp.lt.s32.totalorder %s25, 0
        %s226 = scalar_select %p225, %s25, 0
        %s227 = scalar_lea.vmem %s1, %s226
        %p228 = scmp.lt.s32.totalorder %s25, 0
        %s229 = scalar_select %p228, %s25, 0
        %s230 = scalar_lea.vmem %s2, %s229
        %v231 = vld [vmem:[%s196] sm:$0xff]
        %vm232 = vcmask 261120
        %v233 = vsel %vm232, %v231, 0.0
        %v234 = vrot.slane %v233, 4
        %v235 = vadd.f32 %v233, %v234
        %v236 = vrot.slane %v235, 2
        %v237 = vadd.f32 %v235, %v236
        %v238 = vrot.slane %v237, 1
        %v239 = vadd.f32 %v237, %v238
        %v240 = vmul.f32 %v231, %v231
        %v241 = vsel %vm232, %v240, 0.0
        %v242 = vrot.slane %v241, 4
        %v243 = vadd.f32 %v241, %v242
        %v244 = vrot.slane %v243, 2
        %v245 = vadd.f32 %v243, %v244
        %v246 = vrot.slane %v245, 1
        %v247 = vadd.f32 %v245, %v246
        %v248 = vmul.f32 %v239, 0.125
        %v249 = vmul.f32 %v247, 0.125
        %v250 = vmul.f32 %v248, %v248
        %v251 = vsub.f32 %v249, %v250
        %v252 = vmax.f32 %v251, 0.0
        %v253 = vadd.f32 %v252, 1e-05
        %v254 = vrsqrt.pop %v253
        %v255 = vsub.f32 0.0, %v248
        %v256 = vmul.f32 %v255, %v254
        %v257 = vld [vmem:[%s227] sm:$0x1]
        %v258 = vld [vmem:[%s230] sm:$0x1]
        %v259 = vmul.f32 %v254, %v257
        %v260 = vmul.f32 %v256, %v257
        %v261 = vadd.f32 %v260, %v258
        %v262 = vlaneseq
        %v263 = vshrl.u32 %v262, 7
        %v264 = vsub.s32 0, %v263
        %v265 = vrot.slane %v259, %v264
        %v266 = vmul.f32 %v231, %v265
        %v267 = vlaneseq
        %v268 = vshrl.u32 %v267, 7
        %v269 = vsub.s32 0, %v268
        %v270 = vrot.slane %v261, %v269
        %v271 = vadd.f32 %v266, %v270
        %272 = vst.msk [vmem:[%s224] sm:$0xff] %vm232, %v271
        %s273 = sand.u32 %s122, 1
        %s274 = scalar_lea.sflag [#allocation4], %s273
        %s275 = sand.u32 %s122, 1
        %s276 = smul.addr %s275, 8
        %s277 = scalar_lea.vmem [#allocation5], %s276
        // Predicated region
        $region37: #{tpu_custom_call.1} parent=31 // pred_check
          %p278 = pneg %p132
        $region38: #{tpu_custom_call.1} parent=31 // pred_check_branch
          %280 = sbr.rel (%p278) target = $region40
        $region39: #{tpu_custom_call.1} parent=31 // pred_region
          %s282 = ssub.s32 128, 128
          %283 = vsyncadd %s274, %s282
          %s284 = sadd.s32 %s25, %s24
          %s285 = smul.addr %s284, 128
          %s286 = scalar_lea.hbm %s3, %s285
          %s288 = sshll.u32 %s277, 4
          %s289 = int_to_ptr.vmem [resolvable:$true] %s288
          %291 = dma.vmem_to_hbm [thread:$0]  %s289, 128, %s286, %s274
        $region40: #{tpu_custom_call.1} parent=31 // pred_fallthru
          _
      $region32: #{tpu_custom_call.1} parent=5 // pred_fallthru
        _
      %p292 = scmp.le.s32.totalorder 2, %s15
      // Predicated region
      $region41: #{tpu_custom_call.1} parent=5 // pred_check
        %p293 = pneg %p292
      $region42: #{tpu_custom_call.1} parent=5 // pred_check_branch
        %295 = sbr.rel (%p293) target = $region44
      $region43: #{tpu_custom_call.1} parent=5 // pred_region
        %s296 = ssub.s32 %s15, 2
        // Predicated region
        $region45: #{tpu_custom_call.1} parent=43 // pred_check
          %p297 = pneg %p138
        $region46: #{tpu_custom_call.1} parent=43 // pred_check_branch
          %299 = sbr.rel (%p297) target = $region48
        $region47: #{tpu_custom_call.1} parent=43 // pred_region
          %s300 = sand.u32 %s123, 1
          %s301 = scalar_lea.sflag [#allocation4], %s300
          %s302 = sand.u32 %s123, 1
          %s303 = smul.addr %s302, 8
          %s304 = scalar_lea.vmem [#allocation5], %s303
          %305 = dma.done %s301, 128
        $region48: #{tpu_custom_call.1} parent=43 // pred_fallthru
          _
      $region44: #{tpu_custom_call.1} parent=5 // pred_fallthru
        _
    $region6: #{tpu_custom_call.1} parent=1 // loop_footer
      %s19 = sadd.s32 1, %s15
    $region7: #{tpu_custom_call.1} parent=1 // loop_footer_branch
      %14 = sbr.rel target = $region3
    $region8: #{tpu_custom_call.1} parent=1 // loop_exit
      _
    %306 = vsyncpa [#allocation3], 1
    %s307 = scalar_lea.sflag [#allocation3], 1
    %308 = vsyncpa %s307, 1
    %309 = vsyncpa [#allocation4], 1
    %s310 = scalar_lea.sflag [#allocation4], 1
    %311 = vsyncpa %s310, 1

</llo_original>
